<compile_context>
chip_gen: v6e
topology: v6e:2x2x1
jax: 0.10.0
libtpu: 0.0.40
codegen_flags: <defaults>
</compile_context>

<pallas_src>
import jax
import jax.numpy as jnp
from jax.experimental import pallas as pl
from jax.experimental.pallas import tpu as pltpu


_LANES = 128
_SUBLANES = 8
# Inputs with at most this many 128-lane rows (64 KiB/array) run as a single
# block / single grid step: they are launch-overhead bound regardless, and a
# low cutoff means anything pipeline-worthy goes through the tiled path.
_SINGLE_BLOCK_ROWS = 512


def _round_up(x, m):
    return (x + m - 1) // m * m


def _tile_rows_cap():
    """Generation-aware per-block row cap for the tiled path.

    Block = (tile_rows, 128) f32.  3 arrays x 2 pipeline buffers must fit the
    scoped-VMEM default of the generation (v5e 16 MiB, v6e/v7x 32 MiB):
      v5e / unknown: 1024 rows -> 512 KiB/array ->  3 MiB double-buffered
      v6e:           2048 rows ->   1 MiB/array ->  6 MiB double-buffered
      v7x:           4096 rows ->   2 MiB/array -> 12 MiB double-buffered
    """
    try:
        kind = jax.devices()[0].device_kind.lower()
    except Exception:
        kind = ""
    if "v6" in kind:
        return 2048
    if "v7" in kind or "7x" in kind:
        return 4096
    return 1024


def _js_kernel(pre_ref, real_ref, out_ref):
    # Compute in f32 regardless of I/O dtype (v5e has no bf16 VPU/EUP).
    pre = pre_ref[...].astype(jnp.float32)
    real = real_ref[...].astype(jnp.float32)
    m = 0.5 * (pre + real)
    # Divide-free 3-log form, identical algebra to the PyTorch module:
    #   0.5*(r*log(r/m) + p*log(p/m)) == 0.5*(r*log r + p*log p) - m*log m
    # NOTE: like the PyTorch reference, zero inputs give NaN (0*log 0).  When
    # pre ~= real the subtraction cancels: absolute error stays ~eps*|p*log p|
    # but the *relative* error of near-zero JSD values can be large.
    jsd = 0.5 * (real * jnp.log(real) + pre * jnp.log(pre)) - m * jnp.log(m)
    out_ref[...] = jsd.astype(out_ref.dtype)


def js_divergence(pre_v, real_v):
    assert pre_v.shape == real_v.shape
    orig_shape = pre_v.shape
    dtype = pre_v.dtype
    n = pre_v.size

    rows_raw = pl.cdiv(n, _LANES)

    if rows_raw <= _SINGLE_BLOCK_ROWS:
        # Small input: one block == full array (block equal to full dims, so
        # no (8,128) divisibility requirement), one grid step.
        # NOTE: for truly tiny inputs (the 8 KiB spec shape) launch + DMA
        # setup dominates and a real pipeline may prefer plain fused jnp; we
        # keep the Pallas path here so this script exercises the kernel.
        tile_rows = rows_raw
        n_pad = rows_raw * _LANES
        grid = (1,)
    else:
        cap = _tile_rows_cap()
        # Guarantee >= 2 blocks so the "parallel" grid axis can shard across
        # v7x's two TensorCores (no-op on single-TC v5e/v6e).
        tile_rows = min(cap, _round_up(pl.cdiv(rows_raw, 2), _SUBLANES))
        chunk = tile_rows * _LANES
        n_pad = _round_up(n, chunk)  # single flat pad; no concatenate copies
        grid = (n_pad // chunk,)

    def to_slab(x):
        xf = x.reshape(-1)
        if n_pad != n:
            # Pad with 1.0: log(1)=0 so the padded tail is exactly 0 (it is
            # sliced off below anyway; this just avoids NaN noise).
            xf = jnp.pad(xf, (0, n_pad - n), constant_values=1.0)
        return xf.reshape(n_pad // _LANES, _LANES)

    pre2d = to_slab(pre_v)
    real2d = to_slab(real_v)
    rows = n_pad // _LANES

    itemsize = jnp.dtype(dtype).itemsize
    cost = pl.CostEstimate(
        flops=10 * n_pad,
        transcendentals=3 * n_pad,
        bytes_accessed=3 * n_pad * itemsize,
    )

    out2d = pl.pallas_call(
        _js_kernel,
        out_shape=jax.ShapeDtypeStruct((rows, _LANES), dtype),
        grid_spec=pltpu.PrefetchScalarGridSpec(
            num_scalar_prefetch=0,
            grid=grid,
            in_specs=[
                pl.BlockSpec((tile_rows, _LANES), lambda i: (i, 0)),
                pl.BlockSpec((tile_rows, _LANES), lambda i: (i, 0)),
            ],
            out_specs=pl.BlockSpec((tile_rows, _LANES), lambda i: (i, 0)),
        ),
        compiler_params=pltpu.CompilerParams(
            dimension_semantics=("parallel",),
        ),
        cost_estimate=cost,
    )(pre2d, real2d)

    return out2d.reshape(-1)[:n].reshape(orig_shape)


def js_reference(pre_v, real_v):
    m = 0.5 * (pre_v + real_v)
    return 0.5 * (real_v * jnp.log(real_v / m) + pre_v * jnp.log(pre_v / m))


if __name__ == "__main__":
    key = jax.random.PRNGKey(0)
    k1, k2, k3, k4 = jax.random.split(key, 4)

    # 1) Spec shape (small, single-block path).
    shape_small = (2, 4, 16, 16)  # NCHW, as a PyTorch caller would pass
    pre_s = jax.nn.softmax(jax.random.normal(k1, shape_small, jnp.float32), axis=-1)
    real_s = jax.nn.softmax(jax.random.normal(k2, shape_small, jnp.float32), axis=-1)
    out_s = jax.block_until_ready(js_divergence(pre_s, real_s))
    ref_s = js_reference(pre_s, real_s)
    assert out_s.shape == shape_small
    assert jnp.allclose(out_s, ref_s, atol=5e-6, rtol=1e-4), "small-shape mismatch"

    # 2) Larger shape to exercise the tiled (>=2 block, pipelined) path.
    shape_big = (8, 4, 64, 64)
    pre_b = jax.nn.softmax(jax.random.normal(k3, shape_big, jnp.float32), axis=-1)
    real_b = jax.nn.softmax(jax.random.normal(k4, shape_big, jnp.float32), axis=-1)
    out_b = jax.block_until_ready(js_divergence(pre_b, real_b))
    ref_b = js_reference(pre_b, real_b)
    assert out_b.shape == shape_big
    assert jnp.allclose(out_b, ref_b, atol=5e-6, rtol=1e-4), "big-shape mismatch"

    print("KERNEL_OK")
</pallas_src>

<mosaic_0001>
module attributes {stable_mosaic.version = 11 : i64} {
  func.func @_js_kernel(%arg0: i32, %arg1: memref<16x128xf32, #tpu.memory_space<vmem>>, %arg2: memref<16x128xf32, #tpu.memory_space<vmem>>, %arg3: memref<16x128xf32, #tpu.memory_space<vmem>>) attributes {dimension_semantics = [#tpu.dimension_semantics<parallel>], iteration_bounds = array<i64: 1>, scalar_prefetch = 0 : i64, scratch_operands = 0 : i64, tpu.core_type = #tpu.core_type<tc>, window_params = [{transform_indices = @transform_0, window_bounds = array<i64: 16, 128>}, {transform_indices = @transform_1, window_bounds = array<i64: 16, 128>}, {transform_indices = @transform_2, window_bounds = array<i64: 16, 128>}]} {
    %c0 = arith.constant 0 : index
    %c0_0 = arith.constant 0 : index
    %0 = vector.load %arg1[%c0, %c0_0] : memref<16x128xf32, #tpu.memory_space<vmem>>, vector<16x128xf32>
    %c0_1 = arith.constant 0 : index
    %c0_2 = arith.constant 0 : index
    %1 = vector.load %arg2[%c0_1, %c0_2] : memref<16x128xf32, #tpu.memory_space<vmem>>, vector<16x128xf32>
    %2 = arith.addf %0, %1 : vector<16x128xf32>
    %cst = arith.constant 5.000000e-01 : f32
    %3 = vector.broadcast %cst : f32 to vector<16x128xf32>
    %4 = arith.mulf %3, %2 : vector<16x128xf32>
    %5 = math.log %1 : vector<16x128xf32>
    %6 = arith.mulf %1, %5 : vector<16x128xf32>
    %7 = math.log %0 : vector<16x128xf32>
    %8 = arith.mulf %0, %7 : vector<16x128xf32>
    %9 = arith.addf %6, %8 : vector<16x128xf32>
    %cst_3 = arith.constant 5.000000e-01 : f32
    %10 = vector.broadcast %cst_3 : f32 to vector<16x128xf32>
    %11 = arith.mulf %10, %9 : vector<16x128xf32>
    %12 = math.log %4 : vector<16x128xf32>
    %13 = arith.mulf %4, %12 : vector<16x128xf32>
    %14 = arith.subf %11, %13 : vector<16x128xf32>
    %c0_4 = arith.constant 0 : index
    %c0_5 = arith.constant 0 : index
    %15 = vector.load %arg3[%c0_4, %c0_5] : memref<16x128xf32, #tpu.memory_space<vmem>>, vector<16x128xf32>
    tpu.vector_store %arg3[%c0_4, %c0_5], %14 {strides = array<i32>} : memref<16x128xf32, #tpu.memory_space<vmem>>, vector<16x128xf32>,
    return
  }
  func.func @transform_0(%arg0: i32) -> (i32, i32) {
    %c0_i32 = arith.constant 0 : i32
    %c0_i32_0 = arith.constant 0 : i32
    return %arg0, %c0_i32 : i32, i32
  }
  func.func @transform_1(%arg0: i32) -> (i32, i32) {
    %c0_i32 = arith.constant 0 : i32
    %c0_i32_0 = arith.constant 0 : i32
    return %arg0, %c0_i32 : i32, i32
  }
  func.func @transform_2(%arg0: i32) -> (i32, i32) {
    %c0_i32 = arith.constant 0 : i32
    %c0_i32_0 = arith.constant 0 : i32
    return %arg0, %c0_i32 : i32, i32
  }
}

</mosaic_0001>

<llo_original>
// kernel: tpu_custom_call.1
$region0: #{tpu_custom_call.1}
  #allocation0 [shape = 'u32[]', space=smem, size = 0x4, offset = 0x4, fixed_abs, tag = 'smem constant byte address 0x4 - core index']
  #allocation1 [shape = 'u32[144,128]{1,0:T(1,128)}', space=vmem, size = 0x12000, scoped, tag = 'internal scratch']
  %s0 = inlined_call_operand.hbm [shape: f32[16,128], index: 0, kind: input, shape index: {}]
  %s1 = inlined_call_operand.hbm [shape: f32[16,128], index: 1, kind: input, shape index: {}]
  %s2 = inlined_call_operand.hbm [shape: f32[16,128], index: 2, kind: output, shape index: {}]
  %s3 = sld [smem:[#allocation0]]
  $region26: #{tpu_custom_call.1} parent=0
    _
  %s5 = ssub.s32 1, %s3
  %s6 = scalar_select 0, %s5, %s3
  $region1: #{tpu_custom_call.1} parent=0
    #allocation2 [shape = 'u8[8192]{0}', space=vmem, size = 0x2000, scoped, tag = 'input window, operand 0, single buffered']
    #allocation3 [shape = 's32[1]{0}', space=sflag, size = 0x4, scoped, tag = 'scoped memory for tpu_custom_call.1']
    #allocation4 [shape = 's32[1]{0}', space=sflag, size = 0x4, scoped, tag = 'scoped memory for tpu_custom_call.1']
    #allocation5 [shape = 'u8[8192]{0}', space=vmem, size = 0x2000, scoped, tag = 'input window, operand 1, single buffered']
    #allocation6 [shape = 's32[1]{0}', space=sflag, size = 0x4, scoped, tag = 'scoped memory for tpu_custom_call.1']
    #allocation7 [shape = 'u8[8192]{0}', space=vmem, size = 0x2000, scoped, tag = 'output window, operand 0, single buffered']
    %7 = vsyncpa [#allocation3], 0
    %8 = vsyncpa [#allocation6], 0
    %9 = vsyncpa [#allocation4], 0
    // Predicated region
    $region2: #{tpu_custom_call.1} parent=1 // pred_check
      _
    $region3: #{tpu_custom_call.1} parent=1 // pred_check_branch
      %11 = sbr.rel (0) target = $region5
    $region4: #{tpu_custom_call.1} parent=1 // pred_region
      %s13 = ssub.s32 256, 256
      %14 = vsyncadd [#allocation3], %s13
      %s15 = sshll.u32 [#allocation2], 4
      %s16 = int_to_ptr.vmem [resolvable:$true] %s15
      %21 = dma.hbm_to_vmem [thread:$0]  %s0, 256, %s16, [#allocation3], 128, 128, 8
    $region5: #{tpu_custom_call.1} parent=1 // pred_fallthru
      _
    // Predicated region
    $region6: #{tpu_custom_call.1} parent=1 // pred_check
      _
    $region7: #{tpu_custom_call.1} parent=1 // pred_check_branch
      %23 = sbr.rel (0) target = $region9
    $region8: #{tpu_custom_call.1} parent=1 // pred_region
      %s25 = ssub.s32 256, 256
      %26 = vsyncadd [#allocation6], %s25
      %s27 = sshll.u32 [#allocation5], 4
      %s28 = int_to_ptr.vmem [resolvable:$true] %s27
      %33 = dma.hbm_to_vmem [thread:$0]  %s1, 256, %s28, [#allocation6], 128, 128, 8
    $region9: #{tpu_custom_call.1} parent=1 // pred_fallthru
      _
    // Predicated region
    $region10: #{tpu_custom_call.1} parent=1 // pred_check
      _
    $region11: #{tpu_custom_call.1} parent=1 // pred_check_branch
      %35 = sbr.rel (0) target = $region13
    $region12: #{tpu_custom_call.1} parent=1 // pred_region
      %36 = dma.done [#allocation3], 256
    $region13: #{tpu_custom_call.1} parent=1 // pred_fallthru
      _
    // Predicated region
    $region14: #{tpu_custom_call.1} parent=1 // pred_check
      _
    $region15: #{tpu_custom_call.1} parent=1 // pred_check_branch
      %38 = sbr.rel (0) target = $region17
    $region16: #{tpu_custom_call.1} parent=1 // pred_region
      %39 = dma.done [#allocation6], 256
    $region17: #{tpu_custom_call.1} parent=1 // pred_fallthru
      _
    %v40 = vld [vmem:[#allocation2] sm:$0xff]
    %v41 = vld [vmem:[#allocation2 + $0x8] sm:$0xff]
    %v42 = vld [vmem:[#allocation5] sm:$0xff]
    %v43 = vld [vmem:[#allocation5 + $0x8] sm:$0xff]
    %v44 = vadd.f32 %v40, %v42
    %v45 = vadd.f32 %v41, %v43
    %v46 = vmul.f32 %v44, 0.5
    %v47 = vmul.f32 %v45, 0.5
    %v48 = vlog2.pop %v42
    %v49 = vmul.f32 %v48, 0.6931472
    %v50 = vlog2.pop %v43
    %v51 = vmul.f32 %v50, 0.6931472
    %v52 = vmul.f32 %v42, %v49
    %v53 = vmul.f32 %v43, %v51
    %v54 = vlog2.pop %v40
    %v55 = vmul.f32 %v54, 0.6931472
    %v56 = vlog2.pop %v41
    %v57 = vmul.f32 %v56, 0.6931472
    %v58 = vmul.f32 %v40, %v55
    %v59 = vmul.f32 %v41, %v57
    %v60 = vadd.f32 %v52, %v58
    %v61 = vadd.f32 %v53, %v59
    %v62 = vmul.f32 %v60, 0.5
    %v63 = vmul.f32 %v61, 0.5
    %v64 = vlog2.pop %v46
    %v65 = vmul.f32 %v64, 0.6931472
    %v66 = vlog2.pop %v47
    %v67 = vmul.f32 %v66, 0.6931472
    %v68 = vmul.f32 %v46, %v65
    %v69 = vmul.f32 %v47, %v67
    %v70 = vsub.f32 %v62, %v68
    %v71 = vsub.f32 %v63, %v69
    %72 = vst [vmem:[#allocation7] sm:$0xff] %v70
    %73 = vst [vmem:[#allocation7 + $0x8] sm:$0xff] %v71
    // Predicated region
    $region18: #{tpu_custom_call.1} parent=1 // pred_check
      _
    $region19: #{tpu_custom_call.1} parent=1 // pred_check_branch
      %75 = sbr.rel (0) target = $region21
    $region20: #{tpu_custom_call.1} parent=1 // pred_region
      %s77 = ssub.s32 256, 256
      %78 = vsyncadd [#allocation4], %s77
      %s79 = sshll.u32 [#allocation7], 4
      %s80 = int_to_ptr.vmem [resolvable:$true] %s79
      %85 = dma.vmem_to_hbm [thread:$0]  %s80, 256, %s2, [#allocation4], 128, 128, 8
    $region21: #{tpu_custom_call.1} parent=1 // pred_fallthru
      _
    // Predicated region
    $region22: #{tpu_custom_call.1} parent=1 // pred_check
      _
    $region23: #{tpu_custom_call.1} parent=1 // pred_check_branch
      %87 = sbr.rel (0) target = $region25
    $region24: #{tpu_custom_call.1} parent=1 // pred_region
      %88 = dma.done [#allocation4], 256
    $region25: #{tpu_custom_call.1} parent=1 // pred_fallthru
      _
    %89 = vsyncpa [#allocation3], 1
    %90 = vsyncpa [#allocation6], 1
    %91 = vsyncpa [#allocation4], 1

</llo_original>
